<compile_context>
chip_gen: v7x
topology: tpu7x:2x2x1
jax: 0.10.0
libtpu: 0.0.40
codegen_flags: <defaults>
</compile_context>

<pallas_src>
import jax
import jax.numpy as jnp
from jax.experimental import pallas as pl
from jax.experimental.pallas import tpu as pltpu

HIDDEN = 32


def mlp_kernel(x_ref, w0_ref, b0_ref, w1_ref, b1_ref,
               w2_ref, b2_ref, w3_ref, b3_ref, o_ref):
    # x block: (g*input_size, tile_cols) bf16, lane-dense (batch on lanes).
    # Weights are bf16 block-diagonal; biases are f32 (g*out, 1) columns that
    # broadcast across the lane (batch) dim.  All dots accumulate in f32.
    x = x_ref[...]
    h = jnp.dot(w0_ref[...], x, preferred_element_type=jnp.float32) + b0_ref[...]
    h = jnp.maximum(h, 0.0).astype(jnp.bfloat16)
    h = jnp.dot(w1_ref[...], h, preferred_element_type=jnp.float32) + b1_ref[...]
    h = jnp.maximum(h, 0.0).astype(jnp.bfloat16)
    h = jnp.dot(w2_ref[...], h, preferred_element_type=jnp.float32) + b2_ref[...]
    h = jnp.maximum(h, 0.0).astype(jnp.bfloat16)
    out = jnp.dot(w3_ref[...], h, preferred_element_type=jnp.float32) + b3_ref[...]
    o_ref[...] = out.astype(o_ref.dtype)


def _cdiv(a, b):
    return (a + b - 1) // b


def _round_up(x, m):
    return _cdiv(x, m) * m


def _pick_group_size():
    """Batch groups packed block-diagonally: match the MXU width."""
    try:
        kind = jax.devices()[0].device_kind.lower()
        if "v6" in kind or "v7" in kind or "7x" in kind:
            return 8          # 256-wide MXU (v6e / v7x)
    except Exception:
        pass
    return 4                  # 128-wide MXU (v5e and older); safe everywhere


def _vmem_limit_bytes():
    try:
        cap = int(pltpu.get_tpu_info().vmem_capacity_bytes)
    except Exception:
        cap = 64 * 1024 * 1024            # conservative (v7x-sized) fallback
    # ~3/4 of physical, capped at 96 MiB: 48 MiB on v7x, 96 MiB on v5e/v6e.
    return min(cap * 3 // 4, 96 * 1024 * 1024)


def _pack_weights(params, g):
    """Replicate each layer's weights into a block-diagonal bf16 matrix."""
    eye = jnp.eye(g, dtype=jnp.float32)
    packed = []
    for w, b in params:
        wbd = jnp.kron(eye, w).astype(jnp.bfloat16)        # (g*out, g*in)
        bbd = jnp.tile(b, (g, 1)).astype(jnp.float32)      # (g*out, 1)
        packed.append((wbd, bbd))
    return packed


def nn_classifier_forward(x, params):
    """x: (N, input_size) f32. params: list of (W, b), W (out, in), b (out, 1)."""
    N, input_size = x.shape
    out_dim = int(params[-1][0].shape[0])

    g = _pick_group_size()
    vmem_limit = _vmem_limit_bytes()
    packed = _pack_weights(params, g)

    # --- tile size from VMEM budget and from N (not hard-coded) -------------
    weight_bytes = sum(int(w.size) * 2 + int(b.size) * 4 for w, b in packed)
    # Per packed column: double-buffered bf16 x block + double-buffered f32
    # out block + ~3 live f32 (g*HIDDEN, tile_cols) activations in VMEM.
    bytes_per_col = (2 * 2 * g * input_size
                     + 2 * 4 * g * out_dim
                     + 3 * 4 * g * HIDDEN)
    budget = vmem_limit // 2 - weight_bytes
    cap_cols = max(128, (max(budget, 0) // bytes_per_col) // 128 * 128)

    n_cols_needed = max(1, _cdiv(N, g))
    # Aim for >=2 grid steps (megacore on v7x) once the batch is big enough,
    # without padding far past N; cap by the VMEM-derived tile size.
    tile_cols = max(128, _round_up(_cdiv(n_cols_needed, 2), 128))
    tile_cols = min(tile_cols, cap_cols)
    n_cols = _round_up(n_cols_needed, tile_cols)
    n_pad = g * n_cols
    grid = (n_cols // tile_cols,)

    # --- cheap packed layout: pad, split batch into g groups, stack rows ----
    x_pad = jnp.pad(x, ((0, n_pad - N), (0, 0)))                 # (n_pad, in)
    xp = (x_pad.reshape(g, n_cols, input_size)
               .transpose(0, 2, 1)
               .reshape(g * input_size, n_cols)
               .astype(jnp.bfloat16))                            # (g*in, n_cols)

    x_spec = pl.BlockSpec((g * input_size, tile_cols), lambda i: (0, i))
    o_spec = pl.BlockSpec((g * out_dim, tile_cols), lambda i: (0, i))

    def const_spec(shape):
        # Full-array block, same block index every step -> loaded once and
        # VMEM-resident across the whole grid.
        return pl.BlockSpec(shape, lambda i: (0, 0))

    flat_args = [xp]
    in_specs = [x_spec]
    for w, b in packed:
        flat_args.extend([w, b])
        in_specs.extend([const_spec(w.shape), const_spec(b.shape)])

    # Truthful cost hint: actual MXU work (block-diag zeros included); the
    # kernel is MXU-push bound, bytes are small.
    flops = int(2 * n_cols * sum(int(w.size) for w, _ in packed))
    bytes_accessed = int(xp.size * 2 + g * out_dim * n_cols * 4 + weight_bytes)

    out_p = pl.pallas_call(
        mlp_kernel,
        out_shape=jax.ShapeDtypeStruct((g * out_dim, n_cols), jnp.float32),
        grid=grid,
        in_specs=in_specs,
        out_specs=o_spec,
        compiler_params=pltpu.CompilerParams(
            dimension_semantics=("parallel",),       # batch tiles independent
            vmem_limit_bytes=int(vmem_limit)),
        cost_estimate=pl.CostEstimate(
            flops=flops, transcendentals=0, bytes_accessed=bytes_accessed),
    )(*flat_args)

    # Un-pack: (g*out, n_cols) -> (n_pad, out) -> slice off padded rows.
    out = (out_p.reshape(g, out_dim, n_cols)
                .transpose(0, 2, 1)
                .reshape(n_pad, out_dim))
    return out[:N]


def init_params(key, input_size, output_size, hidden=HIDDEN):
    """Deterministic synthetic init (PyTorch-Linear-like uniform ranges).

    W stored as (out, in) (PyTorch layout); b stored as (out, 1) column.
    """
    dims = [(input_size, hidden), (hidden, hidden), (hidden, hidden),
            (hidden, output_size)]
    params = []
    for (din, dout) in dims:
        key, kw, kb = jax.random.split(key, 3)
        bound = 1.0 / jnp.sqrt(jnp.float32(din))
        w = jax.random.uniform(kw, (dout, din), jnp.float32, -bound, bound)
        b = jax.random.uniform(kb, (dout, 1), jnp.float32, -bound, bound)
        params.append((w, b))
    return params


def reference_forward(x, params, emulate_bf16=False):
    """Pure-JAX reference. emulate_bf16=True mirrors the kernel's bf16 operand
    / f32 accumulation math for a tight numerical check."""
    h = x
    for i, (w, b) in enumerate(params):
        if emulate_bf16:
            hw = jnp.dot(h.astype(jnp.bfloat16), w.astype(jnp.bfloat16).T,
                         preferred_element_type=jnp.float32)
        else:
            hw = h @ w.T
        h = hw + b.T
        if i < len(params) - 1:
            h = jnp.maximum(h, 0.0)
    return h


if __name__ == "__main__":
    key = jax.random.PRNGKey(0)
    kp, kx1, kx2 = jax.random.split(key, 3)

    input_size, output_size = 4, 1
    params = init_params(kp, input_size, output_size)

    # Small batch (single grid step, single packed tile).
    x = jax.random.normal(kx1, (8, input_size), jnp.float32)
    out = jax.block_until_ready(nn_classifier_forward(x, params))
    assert out.shape == (8, output_size)
    ref_bf16 = reference_forward(x, params, emulate_bf16=True)
    ref_f32 = reference_forward(x, params, emulate_bf16=False)
    assert jnp.allclose(out, ref_bf16, atol=2e-3, rtol=2e-3)
    assert jnp.allclose(out, ref_f32, atol=5e-2, rtol=5e-2)

    # Larger batch with a remainder: exercises padding, the packed layout and
    # a multi-step grid, using the default (VMEM/N-derived) tile size.
    x2 = jax.random.normal(kx2, (2500, input_size), jnp.float32)
    out2 = jax.block_until_ready(nn_classifier_forward(x2, params))
    assert out2.shape == (2500, output_size)
    ref2 = reference_forward(x2, params, emulate_bf16=True)
    assert jnp.allclose(out2, ref2, atol=2e-3, rtol=2e-3)

    print("KERNEL_OK")
</pallas_src>

<mosaic_0001>
module attributes {stable_mosaic.version = 11 : i64} {
  func.func @mlp_kernel(%arg0: i32, %arg1: memref<16x128xbf16, #tpu.memory_space<vmem>>, %arg2: memref<128x16xbf16, #tpu.memory_space<vmem>>, %arg3: memref<128x1xf32, #tpu.memory_space<vmem>>, %arg4: memref<128x128xbf16, #tpu.memory_space<vmem>>, %arg5: memref<128x1xf32, #tpu.memory_space<vmem>>, %arg6: memref<128x128xbf16, #tpu.memory_space<vmem>>, %arg7: memref<128x1xf32, #tpu.memory_space<vmem>>, %arg8: memref<4x128xbf16, #tpu.memory_space<vmem>>, %arg9: memref<4x1xf32, #tpu.memory_space<vmem>>, %arg10: memref<4x128xf32, #tpu.memory_space<vmem>>) attributes {dimension_semantics = [#tpu.dimension_semantics<parallel>], iteration_bounds = array<i64: 1>, scalar_prefetch = 0 : i64, scratch_operands = 0 : i64, tpu.core_type = #tpu.core_type<tc>, window_params = [{transform_indices = @transform_0, window_bounds = array<i64: 16, 128>}, {pipeline_mode = #tpu.pipeline_mode<synchronous>, transform_indices = @transform_1, window_bounds = array<i64: 128, 16>}, {pipeline_mode = #tpu.pipeline_mode<synchronous>, transform_indices = @transform_2, window_bounds = array<i64: 128, 1>}, {pipeline_mode = #tpu.pipeline_mode<synchronous>, transform_indices = @transform_3, window_bounds = array<i64: 128, 128>}, {pipeline_mode = #tpu.pipeline_mode<synchronous>, transform_indices = @transform_4, window_bounds = array<i64: 128, 1>}, {pipeline_mode = #tpu.pipeline_mode<synchronous>, transform_indices = @transform_5, window_bounds = array<i64: 128, 128>}, {pipeline_mode = #tpu.pipeline_mode<synchronous>, transform_indices = @transform_6, window_bounds = array<i64: 128, 1>}, {pipeline_mode = #tpu.pipeline_mode<synchronous>, transform_indices = @transform_7, window_bounds = array<i64: 4, 128>}, {pipeline_mode = #tpu.pipeline_mode<synchronous>, transform_indices = @transform_8, window_bounds = array<i64: 4, 1>}, {transform_indices = @transform_9, window_bounds = array<i64: 4, 128>}]} {
    %c0 = arith.constant 0 : index
    %c0_0 = arith.constant 0 : index
    %0 = vector.load %arg1[%c0, %c0_0] : memref<16x128xbf16, #tpu.memory_space<vmem>>, vector<16x128xbf16>
    %c0_1 = arith.constant 0 : index
    %c0_2 = arith.constant 0 : index
    %1 = vector.load %arg2[%c0_1, %c0_2] : memref<128x16xbf16, #tpu.memory_space<vmem>>, vector<128x16xbf16>
    %cst = arith.constant dense<0.000000e+00> : vector<128x128xf32>
    %2 = tpu.matmul %1, %0, %cst {dimension_numbers = #tpu.dot_dimension_numbers<[1], [0], [0], [1], [0, 0, 1, 1], [], []>} : vector<128x16xbf16>, vector<16x128xbf16>, vector<128x128xf32> -> vector<128x128xf32>
    %c0_3 = arith.constant 0 : index
    %c0_4 = arith.constant 0 : index
    %3 = vector.load %arg3[%c0_3, %c0_4] : memref<128x1xf32, #tpu.memory_space<vmem>>, vector<128x1xf32>
    %4 = vector.broadcast %3 : vector<128x1xf32> to vector<128x128xf32>
    %5 = arith.addf %2, %4 : vector<128x128xf32>
    %cst_5 = arith.constant 0.000000e+00 : f32
    %6 = vector.broadcast %cst_5 : f32 to vector<128x128xf32>
    %7 = arith.maximumf %5, %6 : vector<128x128xf32>
    %8 = arith.truncf %7 : vector<128x128xf32> to vector<128x128xbf16>
    %c0_6 = arith.constant 0 : index
    %c0_7 = arith.constant 0 : index
    %9 = vector.load %arg4[%c0_6, %c0_7] : memref<128x128xbf16, #tpu.memory_space<vmem>>, vector<128x128xbf16>
    %cst_8 = arith.constant dense<0.000000e+00> : vector<128x128xf32>
    %10 = tpu.matmul %9, %8, %cst_8 {dimension_numbers = #tpu.dot_dimension_numbers<[1], [0], [0], [1], [0, 0, 1, 1], [], []>} : vector<128x128xbf16>, vector<128x128xbf16>, vector<128x128xf32> -> vector<128x128xf32>
    %c0_9 = arith.constant 0 : index
    %c0_10 = arith.constant 0 : index
    %11 = vector.load %arg5[%c0_9, %c0_10] : memref<128x1xf32, #tpu.memory_space<vmem>>, vector<128x1xf32>
    %12 = vector.broadcast %11 : vector<128x1xf32> to vector<128x128xf32>
    %13 = arith.addf %10, %12 : vector<128x128xf32>
    %cst_11 = arith.constant 0.000000e+00 : f32
    %14 = vector.broadcast %cst_11 : f32 to vector<128x128xf32>
    %15 = arith.maximumf %13, %14 : vector<128x128xf32>
    %16 = arith.truncf %15 : vector<128x128xf32> to vector<128x128xbf16>
    %c0_12 = arith.constant 0 : index
    %c0_13 = arith.constant 0 : index
    %17 = vector.load %arg6[%c0_12, %c0_13] : memref<128x128xbf16, #tpu.memory_space<vmem>>, vector<128x128xbf16>
    %cst_14 = arith.constant dense<0.000000e+00> : vector<128x128xf32>
    %18 = tpu.matmul %17, %16, %cst_14 {dimension_numbers = #tpu.dot_dimension_numbers<[1], [0], [0], [1], [0, 0, 1, 1], [], []>} : vector<128x128xbf16>, vector<128x128xbf16>, vector<128x128xf32> -> vector<128x128xf32>
    %c0_15 = arith.constant 0 : index
    %c0_16 = arith.constant 0 : index
    %19 = vector.load %arg7[%c0_15, %c0_16] : memref<128x1xf32, #tpu.memory_space<vmem>>, vector<128x1xf32>
    %20 = vector.broadcast %19 : vector<128x1xf32> to vector<128x128xf32>
    %21 = arith.addf %18, %20 : vector<128x128xf32>
    %cst_17 = arith.constant 0.000000e+00 : f32
    %22 = vector.broadcast %cst_17 : f32 to vector<128x128xf32>
    %23 = arith.maximumf %21, %22 : vector<128x128xf32>
    %24 = arith.truncf %23 : vector<128x128xf32> to vector<128x128xbf16>
    %c0_18 = arith.constant 0 : index
    %c0_19 = arith.constant 0 : index
    %25 = vector.load %arg8[%c0_18, %c0_19] : memref<4x128xbf16, #tpu.memory_space<vmem>>, vector<4x128xbf16>
    %cst_20 = arith.constant dense<0.000000e+00> : vector<4x128xf32>
    %26 = tpu.matmul %25, %24, %cst_20 {dimension_numbers = #tpu.dot_dimension_numbers<[1], [0], [0], [1], [0, 0, 1, 1], [], []>} : vector<4x128xbf16>, vector<128x128xbf16>, vector<4x128xf32> -> vector<4x128xf32>
    %c0_21 = arith.constant 0 : index
    %c0_22 = arith.constant 0 : index
    %27 = vector.load %arg9[%c0_21, %c0_22] : memref<4x1xf32, #tpu.memory_space<vmem>>, vector<4x1xf32>
    %28 = vector.broadcast %27 : vector<4x1xf32> to vector<4x128xf32>
    %29 = arith.addf %26, %28 : vector<4x128xf32>
    %c0_23 = arith.constant 0 : index
    %c0_24 = arith.constant 0 : index
    %30 = vector.load %arg10[%c0_23, %c0_24] : memref<4x128xf32, #tpu.memory_space<vmem>>, vector<4x128xf32>
    tpu.vector_store %arg10[%c0_23, %c0_24], %29 {strides = array<i32>} : memref<4x128xf32, #tpu.memory_space<vmem>>, vector<4x128xf32>,
    return
  }
  func.func @transform_0(%arg0: i32) -> (i32, i32) {
    %c0_i32 = arith.constant 0 : i32
    %c0_i32_0 = arith.constant 0 : i32
    return %c0_i32, %arg0 : i32, i32
  }
  func.func @transform_1(%arg0: i32) -> (i32, i32) {
    %c0_i32 = arith.constant 0 : i32
    %c0_i32_0 = arith.constant 0 : i32
    %c0_i32_1 = arith.constant 0 : i32
    return %c0_i32, %c0_i32_0 : i32, i32
  }
  func.func @transform_2(%arg0: i32) -> (i32, i32) {
    %c0_i32 = arith.constant 0 : i32
    %c0_i32_0 = arith.constant 0 : i32
    %c0_i32_1 = arith.constant 0 : i32
    return %c0_i32, %c0_i32_0 : i32, i32
  }
  func.func @transform_3(%arg0: i32) -> (i32, i32) {
    %c0_i32 = arith.constant 0 : i32
    %c0_i32_0 = arith.constant 0 : i32
    %c0_i32_1 = arith.constant 0 : i32
    return %c0_i32, %c0_i32_0 : i32, i32
  }
  func.func @transform_4(%arg0: i32) -> (i32, i32) {
    %c0_i32 = arith.constant 0 : i32
    %c0_i32_0 = arith.constant 0 : i32
    %c0_i32_1 = arith.constant 0 : i32
    return %c0_i32, %c0_i32_0 : i32, i32
  }
  func.func @transform_5(%arg0: i32) -> (i32, i32) {
    %c0_i32 = arith.constant 0 : i32
    %c0_i32_0 = arith.constant 0 : i32
    %c0_i32_1 = arith.constant 0 : i32
    return %c0_i32, %c0_i32_0 : i32, i32
  }
  func.func @transform_6(%arg0: i32) -> (i32, i32) {
    %c0_i32 = arith.constant 0 : i32
    %c0_i32_0 = arith.constant 0 : i32
    %c0_i32_1 = arith.constant 0 : i32
    return %c0_i32, %c0_i32_0 : i32, i32
  }
  func.func @transform_7(%arg0: i32) -> (i32, i32) {
    %c0_i32 = arith.constant 0 : i32
    %c0_i32_0 = arith.constant 0 : i32
    %c0_i32_1 = arith.constant 0 : i32
    return %c0_i32, %c0_i32_0 : i32, i32
  }
  func.func @transform_8(%arg0: i32) -> (i32, i32) {
    %c0_i32 = arith.constant 0 : i32
    %c0_i32_0 = arith.constant 0 : i32
    %c0_i32_1 = arith.constant 0 : i32
    return %c0_i32, %c0_i32_0 : i32, i32
  }
  func.func @transform_9(%arg0: i32) -> (i32, i32) {
    %c0_i32 = arith.constant 0 : i32
    %c0_i32_0 = arith.constant 0 : i32
    return %c0_i32, %arg0 : i32, i32
  }
}

</mosaic_0001>

<llo_original>
// kernel: tpu_custom_call.1
$region0: #{tpu_custom_call.1}
  #allocation0 [shape = 'u32[]', space=smem, size = 0x4, offset = 0x4, fixed_abs, tag = 'smem constant byte address 0x4 - core index']
  #allocation1 [shape = 'u32[144,128]{1,0:T(1,128)}', space=vmem, size = 0x12000, scoped, tag = 'internal scratch']
  %s0 = inlined_call_operand.vmem [shape: bf16[16,128], index: 0, kind: input, shape index: {}]
  %s1 = inlined_call_operand.vmem [shape: bf16[128,16], index: 1, kind: input, shape index: {}]
  %s2 = inlined_call_operand.vmem [shape: f32[128,1], index: 2, kind: input, shape index: {}]
  %s3 = inlined_call_operand.vmem [shape: bf16[128,128], index: 3, kind: input, shape index: {}]
  %s4 = inlined_call_operand.vmem [shape: f32[128,1], index: 4, kind: input, shape index: {}]
  %s5 = inlined_call_operand.vmem [shape: bf16[128,128], index: 5, kind: input, shape index: {}]
  %s6 = inlined_call_operand.vmem [shape: f32[128,1], index: 6, kind: input, shape index: {}]
  %s7 = inlined_call_operand.vmem [shape: bf16[4,128], index: 7, kind: input, shape index: {}]
  %s8 = inlined_call_operand.vmem [shape: f32[4,1], index: 8, kind: input, shape index: {}]
  %s9 = inlined_call_operand.hbm [shape: f32[4,128], index: 9, kind: output, shape index: {}]
  %s10 = sld [smem:[#allocation0]]
  $region46: #{tpu_custom_call.1} parent=0
    _
  %s12 = ssub.s32 1, %s10
  %s13 = scalar_select 0, %s12, %s10
  $region1: #{tpu_custom_call.1} parent=0
    #allocation2 [shape = 'u8[2048]{0}', space=vmem, size = 0x800, scoped, tag = 'output window, operand 0, single buffered']
    #allocation3 [shape = 's32[1]{0}', space=sflag, size = 0x4, scoped, tag = 'scoped memory for tpu_custom_call.1']
    %14 = vsyncpa [#allocation3], 0
    // Predicated region
    $region2: #{tpu_custom_call.1} parent=1 // pred_check
      _
    $region3: #{tpu_custom_call.1} parent=1 // pred_check_branch
      %16 = sbr.rel (0) target = $region5
    $region4: #{tpu_custom_call.1} parent=1 // pred_region
      _
    $region5: #{tpu_custom_call.1} parent=1 // pred_fallthru
      _
    // Predicated region
    $region6: #{tpu_custom_call.1} parent=1 // pred_check
      _
    $region7: #{tpu_custom_call.1} parent=1 // pred_check_branch
      %18 = sbr.rel (0) target = $region9
    $region8: #{tpu_custom_call.1} parent=1 // pred_region
      _
    $region9: #{tpu_custom_call.1} parent=1 // pred_fallthru
      _
    // Predicated region
    $region10: #{tpu_custom_call.1} parent=1 // pred_check
      _
    $region11: #{tpu_custom_call.1} parent=1 // pred_check_branch
      %20 = sbr.rel (0) target = $region13
    $region12: #{tpu_custom_call.1} parent=1 // pred_region
      _
    $region13: #{tpu_custom_call.1} parent=1 // pred_fallthru
      _
    // Predicated region
    $region14: #{tpu_custom_call.1} parent=1 // pred_check
      _
    $region15: #{tpu_custom_call.1} parent=1 // pred_check_branch
      %22 = sbr.rel (0) target = $region17
    $region16: #{tpu_custom_call.1} parent=1 // pred_region
      _
    $region17: #{tpu_custom_call.1} parent=1 // pred_fallthru
      _
    // Predicated region
    $region18: #{tpu_custom_call.1} parent=1 // pred_check
      _
    $region19: #{tpu_custom_call.1} parent=1 // pred_check_branch
      %24 = sbr.rel (0) target = $region21
    $region20: #{tpu_custom_call.1} parent=1 // pred_region
      _
    $region21: #{tpu_custom_call.1} parent=1 // pred_fallthru
      _
    // Predicated region
    $region22: #{tpu_custom_call.1} parent=1 // pred_check
      _
    $region23: #{tpu_custom_call.1} parent=1 // pred_check_branch
      %26 = sbr.rel (0) target = $region25
    $region24: #{tpu_custom_call.1} parent=1 // pred_region
      _
    $region25: #{tpu_custom_call.1} parent=1 // pred_fallthru
      _
    // Predicated region
    $region26: #{tpu_custom_call.1} parent=1 // pred_check
      _
    $region27: #{tpu_custom_call.1} parent=1 // pred_check_branch
      %28 = sbr.rel (0) target = $region29
    $region28: #{tpu_custom_call.1} parent=1 // pred_region
      _
    $region29: #{tpu_custom_call.1} parent=1 // pred_fallthru
      _
    // Predicated region
    $region30: #{tpu_custom_call.1} parent=1 // pred_check
      _
    $region31: #{tpu_custom_call.1} parent=1 // pred_check_branch
      %30 = sbr.rel (0) target = $region33
    $region32: #{tpu_custom_call.1} parent=1 // pred_region
      _
    $region33: #{tpu_custom_call.1} parent=1 // pred_fallthru
      _
    // Predicated region
    $region34: #{tpu_custom_call.1} parent=1 // pred_check
      _
    $region35: #{tpu_custom_call.1} parent=1 // pred_check_branch
      %32 = sbr.rel (0) target = $region37
    $region36: #{tpu_custom_call.1} parent=1 // pred_region
      _
    $region37: #{tpu_custom_call.1} parent=1 // pred_fallthru
      _
    %v34 = vld [vmem:[%s0] sm:$0xf]
    %v35 = vld [vmem:[%s0 + $0x4] sm:$0xf]
    %v36 = vld [vmem:[%s1] sm:$0xf]
    %v37 = vld [vmem:[%s1 + $0x4] sm:$0xf]
    %v38 = vld [vmem:[%s1 + $0x8] sm:$0xf]
    %v39 = vld [vmem:[%s1 + $0xc] sm:$0xf]
    %v40 = vld [vmem:[%s1 + $0x10] sm:$0xf]
    %v41 = vld [vmem:[%s1 + $0x14] sm:$0xf]
    %v42 = vld [vmem:[%s1 + $0x18] sm:$0xf]
    %v43 = vld [vmem:[%s1 + $0x1c] sm:$0xf]
    %v44 = vld [vmem:[%s1 + $0x20] sm:$0xf]
    %v45 = vld [vmem:[%s1 + $0x24] sm:$0xf]
    %v46 = vld [vmem:[%s1 + $0x28] sm:$0xf]
    %v47 = vld [vmem:[%s1 + $0x2c] sm:$0xf]
    %v48 = vld [vmem:[%s1 + $0x30] sm:$0xf]
    %v49 = vld [vmem:[%s1 + $0x34] sm:$0xf]
    %v50 = vld [vmem:[%s1 + $0x38] sm:$0xf]
    %v51 = vld [vmem:[%s1 + $0x3c] sm:$0xf]
    %v52 = vld [vmem:[%s2] sm:$0xff]
    %v53 = vld [vmem:[%s2 + $0x8] sm:$0xff]
    %v54 = vld [vmem:[%s2 + $0x10] sm:$0xff]
    %v55 = vld [vmem:[%s2 + $0x18] sm:$0xff]
    %v56 = vld [vmem:[%s2 + $0x20] sm:$0xff]
    %v57 = vld [vmem:[%s2 + $0x28] sm:$0xff]
    %v58 = vld [vmem:[%s2 + $0x30] sm:$0xff]
    %v59 = vld [vmem:[%s2 + $0x38] sm:$0xff]
    %v60 = vld [vmem:[%s2 + $0x40] sm:$0xff]
    %v61 = vld [vmem:[%s2 + $0x48] sm:$0xff]
    %v62 = vld [vmem:[%s2 + $0x50] sm:$0xff]
    %v63 = vld [vmem:[%s2 + $0x58] sm:$0xff]
    %v64 = vld [vmem:[%s2 + $0x60] sm:$0xff]
    %v65 = vld [vmem:[%s2 + $0x68] sm:$0xff]
    %v66 = vld [vmem:[%s2 + $0x70] sm:$0xff]
    %v67 = vld [vmem:[%s2 + $0x78] sm:$0xff]
    %69 = vset.pattern.permute.xlu0 0
    %70 = vperm.xlu0 %69, %v52
    %v71 = vpop.permute.xlu0 %70
    %74 = vset.pattern.permute.xlu0 0
    %75 = vperm.xlu0 %74, %v53
    %v76 = vpop.permute.xlu0 %75
    %79 = vset.pattern.permute.xlu0 0
    %80 = vperm.xlu0 %79, %v54
    %v81 = vpop.permute.xlu0 %80
    %84 = vset.pattern.permute.xlu0 0
    %85 = vperm.xlu0 %84, %v55
    %v86 = vpop.permute.xlu0 %85
    %89 = vset.pattern.permute.xlu0 0
    %90 = vperm.xlu0 %89, %v56
    %v91 = vpop.permute.xlu0 %90
    %94 = vset.pattern.permute.xlu0 0
    %95 = vperm.xlu0 %94, %v57
    %v96 = vpop.permute.xlu0 %95
    %99 = vset.pattern.permute.xlu0 0
    %100 = vperm.xlu0 %99, %v58
    %v101 = vpop.permute.xlu0 %100
    %104 = vset.pattern.permute.xlu0 0
    %105 = vperm.xlu0 %104, %v59
    %v106 = vpop.permute.xlu0 %105
    %109 = vset.pattern.permute.xlu0 0
    %110 = vperm.xlu0 %109, %v60
    %v111 = vpop.permute.xlu0 %110
    %114 = vset.pattern.permute.xlu0 0
    %115 = vperm.xlu0 %114, %v61
    %v116 = vpop.permute.xlu0 %115
    %119 = vset.pattern.permute.xlu0 0
    %120 = vperm.xlu0 %119, %v62
    %v121 = vpop.permute.xlu0 %120
    %124 = vset.pattern.permute.xlu0 0
    %125 = vperm.xlu0 %124, %v63
    %v126 = vpop.permute.xlu0 %125
    %129 = vset.pattern.permute.xlu0 0
    %130 = vperm.xlu0 %129, %v64
    %v131 = vpop.permute.xlu0 %130
    %134 = vset.pattern.permute.xlu0 0
    %135 = vperm.xlu0 %134, %v65
    %v136 = vpop.permute.xlu0 %135
    %139 = vset.pattern.permute.xlu0 0
    %140 = vperm.xlu0 %139, %v66
    %v141 = vpop.permute.xlu0 %140
    %144 = vset.pattern.permute.xlu0 0
    %145 = vperm.xlu0 %144, %v67
    %v146 = vpop.permute.xlu0 %145
    %v164 = vunpack.c.l.b16 %v36
    %v165 = vunpack.c.l.b16 %v37
    %v166 = vunpack.c.l.b16 %v38
    %v167 = vunpack.c.l.b16 %v39
    %v168 = vunpack.c.l.b16 %v40
    %v169 = vunpack.c.l.b16 %v41
    %v170 = vunpack.c.l.b16 %v42
    %v171 = vunpack.c.l.b16 %v43
    %v172 = vunpack.c.l.b16 %v44
    %v173 = vunpack.c.l.b16 %v45
    %v174 = vunpack.c.l.b16 %v46
    %v175 = vunpack.c.l.b16 %v47
    %v176 = vunpack.c.l.b16 %v48
    %v177 = vunpack.c.l.b16 %v49
    %v178 = vunpack.c.l.b16 %v50
    %v179 = vunpack.c.l.b16 %v51
    %v180 = vpack.c.b16 %v165, %v164
    %v181 = vpack.c.b16 %v167, %v166
    %v182 = vpack.c.b16 %v169, %v168
    %v183 = vpack.c.b16 %v171, %v170
    %v184 = vpack.c.b16 %v173, %v172
    %v185 = vpack.c.b16 %v175, %v174
    %v186 = vpack.c.b16 %v177, %v176
    %v187 = vpack.c.b16 %v179, %v178
    %v190 = vunpack.c.l.b16 %v34
    %v191 = vunpack.c.l.b16 %v35
    %v192 = vpack.c.b16 %v191, %v190
    %vm194 = vcmask 130048
    %v196 = vsel %vm194, %v180, 0
    %v199 = vsel %vm194, %v181, 0
    %v202 = vsel %vm194, %v182, 0
    %v205 = vsel %vm194, %v183, 0
    %v208 = vsel %vm194, %v184, 0
    %v211 = vsel %vm194, %v185, 0
    %v214 = vsel %vm194, %v186, 0
    %v217 = vsel %vm194, %v187, 0
    %219 = vmatprep.subr.bf16.mxu0 0
    %220 = vmatpush1.bf16.msra.mxu0 %v192
    %221 = vmatprep.subr.bf16.mxu0 0
    %222 = vmatpush1.bf16.msra.mxu0 0
    %223 = vmatprep.subr.bf16.mxu0 0
    %224 = vmatpush1.bf16.msra.mxu0 0
    %225 = vmatprep.subr.bf16.mxu0 0
    %226 = vmatpush1.bf16.msra.mxu0 0
    %227 = vmatprep.subr.bf16.mxu0 0
    %228 = vmatpush1.bf16.msra.mxu0 0
    %229 = vmatprep.subr.bf16.mxu0 0
    %230 = vmatpush1.bf16.msra.mxu0 0
    %231 = vmatprep.subr.bf16.mxu0 0
    %232 = vmatpush1.bf16.msra.mxu0 0
    %233 = vmatprep.subr.bf16.mxu0 0
    %234 = vmatpush1.bf16.msra.mxu0 0
    %235 = vmatprep.subr.bf16.mxu0 0
    %236 = vmatpush1.bf16.msra.mxu0 0
    %237 = vmatprep.subr.bf16.mxu0 0
    %238 = vmatpush1.bf16.msra.mxu0 0
    %239 = vmatprep.subr.bf16.mxu0 0
    %240 = vmatpush1.bf16.msra.mxu0 0
    %241 = vmatprep.subr.bf16.mxu0 0
    %242 = vmatpush1.bf16.msra.mxu0 0
    %243 = vmatprep.subr.bf16.mxu0 0
    %244 = vmatpush1.bf16.msra.mxu0 0
    %245 = vmatprep.subr.bf16.mxu0 0
    %246 = vmatpush1.bf16.msra.mxu0 0
    %247 = vmatprep.subr.bf16.mxu0 0
    %248 = vmatpush1.bf16.msra.mxu0 0
    %249 = vmatprep.subr.bf16.mxu0 0
    %250 = vmatpush1.bf16.msra.mxu0 0
    %251 = vmatprep.mubr.bf16.mxu0 0
    %252 = vmatmul.mubr.bf16.gmra.mrb[0].mxu0 %v196
    %v253 = vpop.f32.mrb[0].mxu0
    %v254 = vadd.f32 %v71, %v253
    %v255 = vpop.f32.mrb[0].mxu0
    %v256 = vpop.f32.mrb[0].mxu0
    %v257 = vadd.f32 %v76, %v256
    %v258 = vpop.f32.mrb[0].mxu0
    %259 = vmatprep.mubr.bf16.mxu0 0
    %260 = vmatmul.mubr.bf16.gmra.mrb[0].mxu0 %v199
    %v261 = vpop.f32.mrb[0].mxu0
    %v262 = vadd.f32 %v81, %v261
    %v263 = vpop.f32.mrb[0].mxu0
    %v264 = vpop.f32.mrb[0].mxu0
    %v265 = vadd.f32 %v86, %v264
    %v266 = vpop.f32.mrb[0].mxu0
    %267 = vmatprep.mubr.bf16.mxu0 0
    %268 = vmatmul.mubr.bf16.gmra.mrb[0].mxu0 %v202
    %v269 = vpop.f32.mrb[0].mxu0
    %v270 = vadd.f32 %v91, %v269
    %v271 = vpop.f32.mrb[0].mxu0
    %v272 = vpop.f32.mrb[0].mxu0
    %v273 = vadd.f32 %v96, %v272
    %v274 = vpop.f32.mrb[0].mxu0
    %275 = vmatprep.mubr.bf16.mxu0 0
    %276 = vmatmul.mubr.bf16.gmra.mrb[0].mxu0 %v205
    %v277 = vpop.f32.mrb[0].mxu0
    %v278 = vadd.f32 %v101, %v277
    %v279 = vpop.f32.mrb[0].mxu0
    %v280 = vpop.f32.mrb[0].mxu0
    %v281 = vadd.f32 %v106, %v280
    %v282 = vpop.f32.mrb[0].mxu0
    %283 = vmatprep.mubr.bf16.mxu0 0
    %284 = vmatmul.mubr.bf16.gmra.mrb[0].mxu0 %v208
    %v285 = vpop.f32.mrb[0].mxu0
    %v286 = vadd.f32 %v111, %v285
    %v287 = vpop.f32.mrb[0].mxu0
    %v288 = vpop.f32.mrb[0].mxu0
    %v289 = vadd.f32 %v116, %v288
    %v290 = vpop.f32.mrb[0].mxu0
    %291 = vmatprep.mubr.bf16.mxu0 0
    %292 = vmatmul.mubr.bf16.gmra.mrb[0].mxu0 %v211
    %v293 = vpop.f32.mrb[0].mxu0
    %v294 = vadd.f32 %v121, %v293
    %v295 = vpop.f32.mrb[0].mxu0
    %v296 = vpop.f32.mrb[0].mxu0
    %v297 = vadd.f32 %v126, %v296
    %v298 = vpop.f32.mrb[0].mxu0
    %299 = vmatprep.mubr.bf16.mxu0 0
    %300 = vmatmul.mubr.bf16.gmra.mrb[0].mxu0 %v214
    %v301 = vpop.f32.mrb[0].mxu0
    %v302 = vadd.f32 %v131, %v301
    %v303 = vpop.f32.mrb[0].mxu0
    %v304 = vpop.f32.mrb[0].mxu0
    %v305 = vadd.f32 %v136, %v304
    %v306 = vpop.f32.mrb[0].mxu0
    %307 = vmatprep.mubr.bf16.mxu0 0
    %308 = vmatmul.mubr.bf16.gmra.mrb[0].mxu0 %v217
    %v309 = vpop.f32.mrb[0].mxu0
    %v310 = vadd.f32 %v141, %v309
    %v311 = vpop.f32.mrb[0].mxu0
    %v312 = vpop.f32.mrb[0].mxu0
    %v313 = vadd.f32 %v146, %v312
    %v314 = vpop.f32.mrb[0].mxu0
    %315 = vdwg.mxu0
    %v316 = vmax.f32 %v254, 0.0
    %v317 = vmax.f32 %v257, 0.0
    %v318 = vmax.f32 %v262, 0.0
    %v319 = vmax.f32 %v265, 0.0
    %v320 = vmax.f32 %v270, 0.0
    %v321 = vmax.f32 %v273, 0.0
    %v322 = vmax.f32 %v278, 0.0
    %v323 = vmax.f32 %v281, 0.0
    %v324 = vmax.f32 %v286, 0.0
    %v325 = vmax.f32 %v289, 0.0
    %v326 = vmax.f32 %v294, 0.0
    %v327 = vmax.f32 %v297, 0.0
    %v328 = vmax.f32 %v302, 0.0
    %v329 = vmax.f32 %v305, 0.0
    %v330 = vmax.f32 %v310, 0.0
    %v331 = vmax.f32 %v313, 0.0
    %v332 = vpack.c.bf16 %v317, %v316
    %v333 = vpack.c.bf16 %v319, %v318
    %v334 = vpack.c.bf16 %v321, %v320
    %v335 = vpack.c.bf16 %v323, %v322
    %v336 = vpack.c.bf16 %v325, %v324
    %v337 = vpack.c.bf16 %v327, %v326
    %v338 = vpack.c.bf16 %v329, %v328
    %v339 = vpack.c.bf16 %v331, %v330
    %v340 = vld [vmem:[%s3] sm:$0xf]
    %v341 = vld [vmem:[%s3 + $0x4] sm:$0xf]
    %v342 = vld [vmem:[%s3 + $0x8] sm:$0xf]
    %v343 = vld [vmem:[%s3 + $0xc] sm:$0xf]
    %v344 = vld [vmem:[%s3 + $0x10] sm:$0xf]
    %v345 = vld [vmem:[%s3 + $0x14] sm:$0xf]
    %v346 = vld [vmem:[%s3 + $0x18] sm:$0xf]
    %v347 = vld [vmem:[%s3 + $0x1c] sm:$0xf]
    %v348 = vld [vmem:[%s3 + $0x20] sm:$0xf]
    %v349 = vld [vmem:[%s3 + $0x24] sm:$0xf]
    %v350 = vld [vmem:[%s3 + $0x28] sm:$0xf]
    %v351 = vld [vmem:[%s3 + $0x2c] sm:$0xf]
    %v352 = vld [vmem:[%s3 + $0x30] sm:$0xf]
    %v353 = vld [vmem:[%s3 + $0x34] sm:$0xf]
    %v354 = vld [vmem:[%s3 + $0x38] sm:$0xf]
    %v355 = vld [vmem:[%s3 + $0x3c] sm:$0xf]
    %v356 = vld [vmem:[%s4] sm:$0xff]
    %v357 = vld [vmem:[%s4 + $0x8] sm:$0xff]
    %v358 = vld [vmem:[%s4 + $0x10] sm:$0xff]
    %v359 = vld [vmem:[%s4 + $0x18] sm:$0xff]
    %v360 = vld [vmem:[%s4 + $0x20] sm:$0xff]
    %v361 = vld [vmem:[%s4 + $0x28] sm:$0xff]
    %v362 = vld [vmem:[%s4 + $0x30] sm:$0xff]
    %v363 = vld [vmem:[%s4 + $0x38] sm:$0xff]
    %v364 = vld [vmem:[%s4 + $0x40] sm:$0xff]
    %v365 = vld [vmem:[%s4 + $0x48] sm:$0xff]
    %v366 = vld [vmem:[%s4 + $0x50] sm:$0xff]
    %v367 = vld [vmem:[%s4 + $0x58] sm:$0xff]
    %v368 = vld [vmem:[%s4 + $0x60] sm:$0xff]
    %v369 = vld [vmem:[%s4 + $0x68] sm:$0xff]
    %v370 = vld [vmem:[%s4 + $0x70] sm:$0xff]
    %v371 = vld [vmem:[%s4 + $0x78] sm:$0xff]
    %373 = vset.pattern.permute.xlu0 0
    %374 = vperm.xlu0 %373, %v356
    %v375 = vpop.permute.xlu0 %374
    %378 = vset.pattern.permute.xlu0 0
    %379 = vperm.xlu0 %378, %v357
    %v380 = vpop.permute.xlu0 %379
    %383 = vset.pattern.permute.xlu0 0
    %384 = vperm.xlu0 %383, %v358
    %v385 = vpop.permute.xlu0 %384
    %388 = vset.pattern.permute.xlu0 0
    %389 = vperm.xlu0 %388, %v359
    %v390 = vpop.permute.xlu0 %389
    %393 = vset.pattern.permute.xlu0 0
    %394 = vperm.xlu0 %393, %v360
    %v395 = vpop.permute.xlu0 %394
    %398 = vset.pattern.permute.xlu0 0
    %399 = vperm.xlu0 %398, %v361
    %v400 = vpop.permute.xlu0 %399
    %403 = vset.pattern.permute.xlu0 0
    %404 = vperm.xlu0 %403, %v362
    %v405 = vpop.permute.xlu0 %404
    %408 = vset.pattern.permute.xlu0 0
    %409 = vperm.xlu0 %408, %v363
    %v410 = vpop.permute.xlu0 %409
    %413 = vset.pattern.permute.xlu0 0
    %414 = vperm.xlu0 %413, %v364
    %v415 = vpop.permute.xlu0 %414
    %418 = vset.pattern.permute.xlu0 0
    %419 = vperm.xlu0 %418, %v365
    %v420 = vpop.permute.xlu0 %419
    %423 = vset.pattern.permute.xlu0 0
    %424 = vperm.xlu0 %423, %v366
    %v425 = vpop.permute.xlu0 %424
    %428 = vset.pattern.permute.xlu0 0
    %429 = vperm.xlu0 %428, %v367
    %v430 = vpop.permute.xlu0 %429
    %433 = vset.pattern.permute.xlu0 0
    %434 = vperm.xlu0 %433, %v368
    %v435 = vpop.permute.xlu0 %434
    %438 = vset.pattern.permute.xlu0 0
    %439 = vperm.xlu0 %438, %v369
    %v440 = vpop.permute.xlu0 %439
    %443 = vset.pattern.permute.xlu0 0
    %444 = vperm.xlu0 %443, %v370
    %v445 = vpop.permute.xlu0 %444
    %448 = vset.pattern.permute.xlu0 0
    %449 = vperm.xlu0 %448, %v371
    %v450 = vpop.permute.xlu0 %449
    %v468 = vunpack.c.l.b16 %v340
    %v469 = vunpack.c.l.b16 %v341
    %v470 = vunpack.c.l.b16 %v342
    %v471 = vunpack.c.l.b16 %v343
    %v472 = vunpack.c.l.b16 %v344
    %v473 = vunpack.c.l.b16 %v345
    %v474 = vunpack.c.l.b16 %v346
    %v475 = vunpack.c.l.b16 %v347
    %v476 = vunpack.c.l.b16 %v348
    %v477 = vunpack.c.l.b16 %v349
    %v478 = vunpack.c.l.b16 %v350
    %v479 = vunpack.c.l.b16 %v351
    %v480 = vunpack.c.l.b16 %v352
    %v481 = vunpack.c.l.b16 %v353
    %v482 = vunpack.c.l.b16 %v354
    %v483 = vunpack.c.l.b16 %v355
    %v484 = vpack.c.b16 %v469, %v468
    %v485 = vpack.c.b16 %v471, %v470
    %v486 = vpack.c.b16 %v473, %v472
    %v487 = vpack.c.b16 %v475, %v474
    %v488 = vpack.c.b16 %v477, %v476
    %v489 = vpack.c.b16 %v479, %v478
    %v490 = vpack.c.b16 %v481, %v480
    %v491 = vpack.c.b16 %v483, %v482
    %500 = vmatprep.subr.bf16.mxu0 0
    %501 = vmatpush1.bf16.msra.mxu0 %v332
    %502 = vmatprep.subr.bf16.mxu0 0
    %503 = vmatpush1.bf16.msra.mxu0 %v333
    %504 = vmatprep.subr.bf16.mxu0 0
    %505 = vmatpush1.bf16.msra.mxu0 %v334
    %506 = vmatprep.subr.bf16.mxu0 0
    %507 = vmatpush1.bf16.msra.mxu0 %v335
    %508 = vmatprep.subr.bf16.mxu0 0
    %509 = vmatpush1.bf16.msra.mxu0 %v336
    %510 = vmatprep.subr.bf16.mxu0 0
    %511 = vmatpush1.bf16.msra.mxu0 %v337
    %512 = vmatprep.subr.bf16.mxu0 0
    %513 = vmatpush1.bf16.msra.mxu0 %v338
    %514 = vmatprep.subr.bf16.mxu0 0
    %515 = vmatpush1.bf16.msra.mxu0 %v339
    %516 = vmatprep.subr.bf16.mxu0 0
    %517 = vmatpush1.bf16.msra.mxu0 0
    %518 = vmatprep.subr.bf16.mxu0 0
    %519 = vmatpush1.bf16.msra.mxu0 0
    %520 = vmatprep.subr.bf16.mxu0 0
    %521 = vmatpush1.bf16.msra.mxu0 0
    %522 = vmatprep.subr.bf16.mxu0 0
    %523 = vmatpush1.bf16.msra.mxu0 0
    %524 = vmatprep.subr.bf16.mxu0 0
    %525 = vmatpush1.bf16.msra.mxu0 0
    %526 = vmatprep.subr.bf16.mxu0 0
    %527 = vmatpush1.bf16.msra.mxu0 0
    %528 = vmatprep.subr.bf16.mxu0 0
    %529 = vmatpush1.bf16.msra.mxu0 0
    %530 = vmatprep.subr.bf16.mxu0 0
    %531 = vmatpush1.bf16.msra.mxu0 0
    %532 = vmatprep.mubr.bf16.mxu0 0
    %533 = vmatmul.mubr.bf16.gmra.mrb[0].mxu0 %v484
    %v534 = vpop.f32.mrb[0].mxu0
    %v535 = vadd.f32 %v375, %v534
    %v536 = vpop.f32.mrb[0].mxu0
    %v537 = vpop.f32.mrb[0].mxu0
    %v538 = vadd.f32 %v380, %v537
    %v539 = vpop.f32.mrb[0].mxu0
    %540 = vmatprep.mubr.bf16.mxu0 0
    %541 = vmatmul.mubr.bf16.gmra.mrb[0].mxu0 %v485
    %v542 = vpop.f32.mrb[0].mxu0
    %v543 = vadd.f32 %v385, %v542
    %v544 = vpop.f32.mrb[0].mxu0
    %v545 = vpop.f32.mrb[0].mxu0
    %v546 = vadd.f32 %v390, %v545
    %v547 = vpop.f32.mrb[0].mxu0
    %548 = vmatprep.mubr.bf16.mxu0 0
    %549 = vmatmul.mubr.bf16.gmra.mrb[0].mxu0 %v486
    %v550 = vpop.f32.mrb[0].mxu0
    %v551 = vadd.f32 %v395, %v550
    %v552 = vpop.f32.mrb[0].mxu0
    %v553 = vpop.f32.mrb[0].mxu0
    %v554 = vadd.f32 %v400, %v553
    %v555 = vpop.f32.mrb[0].mxu0
    %556 = vmatprep.mubr.bf16.mxu0 0
    %557 = vmatmul.mubr.bf16.gmra.mrb[0].mxu0 %v487
    %v558 = vpop.f32.mrb[0].mxu0
    %v559 = vadd.f32 %v405, %v558
    %v560 = vpop.f32.mrb[0].mxu0
    %v561 = vpop.f32.mrb[0].mxu0
    %v562 = vadd.f32 %v410, %v561
    %v563 = vpop.f32.mrb[0].mxu0
    %564 = vmatprep.mubr.bf16.mxu0 0
    %565 = vmatmul.mubr.bf16.gmra.mrb[0].mxu0 %v488
    %v566 = vpop.f32.mrb[0].mxu0
    %v567 = vadd.f32 %v415, %v566
    %v568 = vpop.f32.mrb[0].mxu0
    %v569 = vpop.f32.mrb[0].mxu0
    %v570 = vadd.f32 %v420, %v569
    %v571 = vpop.f32.mrb[0].mxu0
    %572 = vmatprep.mubr.bf16.mxu0 0
    %573 = vmatmul.mubr.bf16.gmra.mrb[0].mxu0 %v489
    %v574 = vpop.f32.mrb[0].mxu0
    %v575 = vadd.f32 %v425, %v574
    %v576 = vpop.f32.mrb[0].mxu0
    %v577 = vpop.f32.mrb[0].mxu0
    %v578 = vadd.f32 %v430, %v577
    %v579 = vpop.f32.mrb[0].mxu0
    %580 = vmatprep.mubr.bf16.mxu0 0
    %581 = vmatmul.mubr.bf16.gmra.mrb[0].mxu0 %v490
    %v582 = vpop.f32.mrb[0].mxu0
    %v583 = vadd.f32 %v435, %v582
    %v584 = vpop.f32.mrb[0].mxu0
    %v585 = vpop.f32.mrb[0].mxu0
    %v586 = vadd.f32 %v440, %v585
    %v587 = vpop.f32.mrb[0].mxu0
    %588 = vmatprep.mubr.bf16.mxu0 0
    %589 = vmatmul.mubr.bf16.gmra.mrb[0].mxu0 %v491
    %v590 = vpop.f32.mrb[0].mxu0
    %v591 = vadd.f32 %v445, %v590
    %v592 = vpop.f32.mrb[0].mxu0
    %v593 = vpop.f32.mrb[0].mxu0
    %v594 = vadd.f32 %v450, %v593
    %v595 = vpop.f32.mrb[0].mxu0
    %596 = vdwg.mxu0
    %v597 = vmax.f32 %v535, 0.0
    %v598 = vmax.f32 %v538, 0.0
    %v599 = vmax.f32 %v543, 0.0
    %v600 = vmax.f32 %v546, 0.0
    %v601 = vmax.f32 %v551, 0.0
    %v602 = vmax.f32 %v554, 0.0
    %v603 = vmax.f32 %v559, 0.0
    %v604 = vmax.f32 %v562, 0.0
    %v605 = vmax.f32 %v567, 0.0
    %v606 = vmax.f32 %v570, 0.0
    %v607 = vmax.f32 %v575, 0.0
    %v608 = vmax.f32 %v578, 0.0
    %v609 = vmax.f32 %v583, 0.0
    %v610 = vmax.f32 %v586, 0.0
    %v611 = vmax.f32 %v591, 0.0
    %v612 = vmax.f32 %v594, 0.0
    %v613 = vpack.c.bf16 %v598, %v597
    %v614 = vpack.c.bf16 %v600, %v599
    %v615 = vpack.c.bf16 %v602, %v601
    %v616 = vpack.c.bf16 %v604, %v603
    %v617 = vpack.c.bf16 %v606, %v605
    %v618 = vpack.c.bf16 %v608, %v607
    %v619 = vpack.c.bf16 %v610, %v609
    %v620 = vpack.c.bf16 %v612, %v611
    %v621 = vld [vmem:[%s5] sm:$0xf]
    %v622 = vld [vmem:[%s5 + $0x4] sm:$0xf]
    %v623 = vld [vmem:[%s5 + $0x8] sm:$0xf]
    %v624 = vld [vmem:[%s5 + $0xc] sm:$0xf]
    %v625 = vld [vmem:[%s5 + $0x10] sm:$0xf]
    %v626 = vld [vmem:[%s5 + $0x14] sm:$0xf]
    %v627 = vld [vmem:[%s5 + $0x18] sm:$0xf]
    %v628 = vld [vmem:[%s5 + $0x1c] sm:$0xf]
    %v629 = vld [vmem:[%s5 + $0x20] sm:$0xf]
    %v630 = vld [vmem:[%s5 + $0x24] sm:$0xf]
    %v631 = vld [vmem:[%s5 + $0x28] sm:$0xf]
    %v632 = vld [vmem:[%s5 + $0x2c] sm:$0xf]
    %v633 = vld [vmem:[%s5 + $0x30] sm:$0xf]
    %v634 = vld [vmem:[%s5 + $0x34] sm:$0xf]
    %v635 = vld [vmem:[%s5 + $0x38] sm:$0xf]
    %v636 = vld [vmem:[%s5 + $0x3c] sm:$0xf]
    %v637 = vld [vmem:[%s6] sm:$0xff]
    %v638 = vld [vmem:[%s6 + $0x8] sm:$0xff]
    %v639 = vld [vmem:[%s6 + $0x10] sm:$0xff]
    %v640 = vld [vmem:[%s6 + $0x18] sm:$0xff]
    %v641 = vld [vmem:[%s6 + $0x20] sm:$0xff]
    %v642 = vld [vmem:[%s6 + $0x28] sm:$0xff]
    %v643 = vld [vmem:[%s6 + $0x30] sm:$0xff]
    %v644 = vld [vmem:[%s6 + $0x38] sm:$0xff]
    %v645 = vld [vmem:[%s6 + $0x40] sm:$0xff]
    %v646 = vld [vmem:[%s6 + $0x48] sm:$0xff]
    %v647 = vld [vmem:[%s6 + $0x50] sm:$0xff]
    %v648 = vld [vmem:[%s6 + $0x58] sm:$0xff]
    %v649 = vld [vmem:[%s6 + $0x60] sm:$0xff]
    %v650 = vld [vmem:[%s6 + $0x68] sm:$0xff]
    %v651 = vld [vmem:[%s6 + $0x70] sm:$0xff]
    %v652 = vld [vmem:[%s6 + $0x78] sm:$0xff]
    %654 = vset.pattern.permute.xlu0 0
    %655 = vperm.xlu0 %654, %v637
    %v656 = vpop.permute.xlu0 %655
    %659 = vset.pattern.permute.xlu0 0
    %660 = vperm.xlu0 %659, %v638
    %v661 = vpop.permute.xlu0 %660
    %664 = vset.pattern.permute.xlu0 0
    %665 = vperm.xlu0 %664, %v639
    %v666 = vpop.permute.xlu0 %665
    %669 = vset.pattern.permute.xlu0 0
    %670 = vperm.xlu0 %669, %v640
    %v671 = vpop.permute.xlu0 %670
    %674 = vset.pattern.permute.xlu0 0
    %675 = vperm.xlu0 %674, %v641
    %v676 = vpop.permute.xlu0 %675
    %679 = vset.pattern.permute.xlu0 0
    %680 = vperm.xlu0 %679, %v642
    %v681 = vpop.permute.xlu0 %680
    %684 = vset.pattern.permute.xlu0 0
    %685 = vperm.xlu0 %684, %v643
    %v686 = vpop.permute.xlu0 %685
    %689 = vset.pattern.permute.xlu0 0
    %690 = vperm.xlu0 %689, %v644
    %v691 = vpop.permute.xlu0 %690
    %694 = vset.pattern.permute.xlu0 0
    %695 = vperm.xlu0 %694, %v645
    %v696 = vpop.permute.xlu0 %695
    %699 = vset.pattern.permute.xlu0 0
    %700 = vperm.xlu0 %699, %v646
    %v701 = vpop.permute.xlu0 %700
    %704 = vset.pattern.permute.xlu0 0
    %705 = vperm.xlu0 %704, %v647
    %v706 = vpop.permute.xlu0 %705
    %709 = vset.pattern.permute.xlu0 0
    %710 = vperm.xlu0 %709, %v648
    %v711 = vpop.permute.xlu0 %710
    %714 = vset.pattern.permute.xlu0 0
    %715 = vperm.xlu0 %714, %v649
    %v716 = vpop.permute.xlu0 %715
    %719 = vset.pattern.permute.xlu0 0
    %720 = vperm.xlu0 %719, %v650
    %v721 = vpop.permute.xlu0 %720
    %724 = vset.pattern.permute.xlu0 0
    %725 = vperm.xlu0 %724, %v651
    %v726 = vpop.permute.xlu0 %725
    %729 = vset.pattern.permute.xlu0 0
    %730 = vperm.xlu0 %729, %v652
    %v731 = vpop.permute.xlu0 %730
    %v749 = vunpack.c.l.b16 %v621
    %v750 = vunpack.c.l.b16 %v622
    %v751 = vunpack.c.l.b16 %v623
    %v752 = vunpack.c.l.b16 %v624
    %v753 = vunpack.c.l.b16 %v625
    %v754 = vunpack.c.l.b16 %v626
    %v755 = vunpack.c.l.b16 %v627
    %v756 = vunpack.c.l.b16 %v628
    %v757 = vunpack.c.l.b16 %v629
    %v758 = vunpack.c.l.b16 %v630
    %v759 = vunpack.c.l.b16 %v631
    %v760 = vunpack.c.l.b16 %v632
    %v761 = vunpack.c.l.b16 %v633
    %v762 = vunpack.c.l.b16 %v634
    %v763 = vunpack.c.l.b16 %v635
    %v764 = vunpack.c.l.b16 %v636
    %v765 = vpack.c.b16 %v750, %v749
    %v766 = vpack.c.b16 %v752, %v751
    %v767 = vpack.c.b16 %v754, %v753
    %v768 = vpack.c.b16 %v756, %v755
    %v769 = vpack.c.b16 %v758, %v757
    %v770 = vpack.c.b16 %v760, %v759
    %v771 = vpack.c.b16 %v762, %v761
    %v772 = vpack.c.b16 %v764, %v763
    %781 = vmatprep.subr.bf16.mxu0 0
    %782 = vmatpush1.bf16.msra.mxu0 %v613
    %783 = vmatprep.subr.bf16.mxu0 0
    %784 = vmatpush1.bf16.msra.mxu0 %v614
    %785 = vmatprep.subr.bf16.mxu0 0
    %786 = vmatpush1.bf16.msra.mxu0 %v615
    %787 = vmatprep.subr.bf16.mxu0 0
    %788 = vmatpush1.bf16.msra.mxu0 %v616
    %789 = vmatprep.subr.bf16.mxu0 0
    %790 = vmatpush1.bf16.msra.mxu0 %v617
    %791 = vmatprep.subr.bf16.mxu0 0
    %792 = vmatpush1.bf16.msra.mxu0 %v618
    %793 = vmatprep.subr.bf16.mxu0 0
    %794 = vmatpush1.bf16.msra.mxu0 %v619
    %795 = vmatprep.subr.bf16.mxu0 0
    %796 = vmatpush1.bf16.msra.mxu0 %v620
    %797 = vmatprep.subr.bf16.mxu0 0
    %798 = vmatpush1.bf16.msra.mxu0 0
    %799 = vmatprep.subr.bf16.mxu0 0
    %800 = vmatpush1.bf16.msra.mxu0 0
    %801 = vmatprep.subr.bf16.mxu0 0
    %802 = vmatpush1.bf16.msra.mxu0 0
    %803 = vmatprep.subr.bf16.mxu0 0
    %804 = vmatpush1.bf16.msra.mxu0 0
    %805 = vmatprep.subr.bf16.mxu0 0
    %806 = vmatpush1.bf16.msra.mxu0 0
    %807 = vmatprep.subr.bf16.mxu0 0
    %808 = vmatpush1.bf16.msra.mxu0 0
    %809 = vmatprep.subr.bf16.mxu0 0
    %810 = vmatpush1.bf16.msra.mxu0 0
    %811 = vmatprep.subr.bf16.mxu0 0
    %812 = vmatpush1.bf16.msra.mxu0 0
    %813 = vmatprep.mubr.bf16.mxu0 0
    %814 = vmatmul.mubr.bf16.gmra.mrb[0].mxu0 %v765
    %v815 = vpop.f32.mrb[0].mxu0
    %v816 = vadd.f32 %v656, %v815
    %v817 = vpop.f32.mrb[0].mxu0
    %v818 = vpop.f32.mrb[0].mxu0
    %v819 = vadd.f32 %v661, %v818
    %v820 = vpop.f32.mrb[0].mxu0
    %821 = vmatprep.mubr.bf16.mxu0 0
    %822 = vmatmul.mubr.bf16.gmra.mrb[0].mxu0 %v766
    %v823 = vpop.f32.mrb[0].mxu0
    %v824 = vadd.f32 %v666, %v823
    %v825 = vpop.f32.mrb[0].mxu0
    %v826 = vpop.f32.mrb[0].mxu0
    %v827 = vadd.f32 %v671, %v826
    %v828 = vpop.f32.mrb[0].mxu0
    %829 = vmatprep.mubr.bf16.mxu0 0
    %830 = vmatmul.mubr.bf16.gmra.mrb[0].mxu0 %v767
    %v831 = vpop.f32.mrb[0].mxu0
    %v832 = vadd.f32 %v676, %v831
    %v833 = vpop.f32.mrb[0].mxu0
    %v834 = vpop.f32.mrb[0].mxu0
    %v835 = vadd.f32 %v681, %v834
    %v836 = vpop.f32.mrb[0].mxu0
    %837 = vmatprep.mubr.bf16.mxu0 0
    %838 = vmatmul.mubr.bf16.gmra.mrb[0].mxu0 %v768
    %v839 = vpop.f32.mrb[0].mxu0
    %v840 = vadd.f32 %v686, %v839
    %v841 = vpop.f32.mrb[0].mxu0
    %v842 = vpop.f32.mrb[0].mxu0
    %v843 = vadd.f32 %v691, %v842
    %v844 = vpop.f32.mrb[0].mxu0
    %845 = vmatprep.mubr.bf16.mxu0 0
    %846 = vmatmul.mubr.bf16.gmra.mrb[0].mxu0 %v769
    %v847 = vpop.f32.mrb[0].mxu0
    %v848 = vadd.f32 %v696, %v847
    %v849 = vpop.f32.mrb[0].mxu0
    %v850 = vpop.f32.mrb[0].mxu0
    %v851 = vadd.f32 %v701, %v850
    %v852 = vpop.f32.mrb[0].mxu0
    %853 = vmatprep.mubr.bf16.mxu0 0
    %854 = vmatmul.mubr.bf16.gmra.mrb[0].mxu0 %v770
    %v855 = vpop.f32.mrb[0].mxu0
    %v856 = vadd.f32 %v706, %v855
    %v857 = vpop.f32.mrb[0].mxu0
    %v858 = vpop.f32.mrb[0].mxu0
    %v859 = vadd.f32 %v711, %v858
    %v860 = vpop.f32.mrb[0].mxu0
    %861 = vmatprep.mubr.bf16.mxu0 0
    %862 = vmatmul.mubr.bf16.gmra.mrb[0].mxu0 %v771
    %v863 = vpop.f32.mrb[0].mxu0
    %v864 = vadd.f32 %v716, %v863
    %v865 = vpop.f32.mrb[0].mxu0
    %v866 = vpop.f32.mrb[0].mxu0
    %v867 = vadd.f32 %v721, %v866
    %v868 = vpop.f32.mrb[0].mxu0
    %869 = vmatprep.mubr.bf16.mxu0 0
    %870 = vmatmul.mubr.bf16.gmra.mrb[0].mxu0 %v772
    %v871 = vpop.f32.mrb[0].mxu0
    %v872 = vadd.f32 %v726, %v871
    %v873 = vpop.f32.mrb[0].mxu0
    %v874 = vpop.f32.mrb[0].mxu0
    %v875 = vadd.f32 %v731, %v874
    %v876 = vpop.f32.mrb[0].mxu0
    %877 = vdwg.mxu0
    %v878 = vmax.f32 %v816, 0.0
    %v879 = vmax.f32 %v819, 0.0
    %v880 = vmax.f32 %v824, 0.0
    %v881 = vmax.f32 %v827, 0.0
    %v882 = vmax.f32 %v832, 0.0
    %v883 = vmax.f32 %v835, 0.0
    %v884 = vmax.f32 %v840, 0.0
    %v885 = vmax.f32 %v843, 0.0
    %v886 = vmax.f32 %v848, 0.0
    %v887 = vmax.f32 %v851, 0.0
    %v888 = vmax.f32 %v856, 0.0
    %v889 = vmax.f32 %v859, 0.0
    %v890 = vmax.f32 %v864, 0.0
    %v891 = vmax.f32 %v867, 0.0
    %v892 = vmax.f32 %v872, 0.0
    %v893 = vmax.f32 %v875, 0.0
    %v894 = vpack.c.bf16 %v879, %v878
    %v895 = vpack.c.bf16 %v881, %v880
    %v896 = vpack.c.bf16 %v883, %v882
    %v897 = vpack.c.bf16 %v885, %v884
    %v898 = vpack.c.bf16 %v887, %v886
    %v899 = vpack.c.bf16 %v889, %v888
    %v900 = vpack.c.bf16 %v891, %v890
    %v901 = vpack.c.bf16 %v893, %v892
    %v902 = vld [vmem:[%s7] sm:$0x3]
    %v903 = vld [vmem:[%s8] sm:$0xf]
    %905 = vset.pattern.permute.xlu0 0
    %906 = vperm.xlu0 %905, %v903
    %v907 = vpop.permute.xlu0 %906
    %909 = vmatprep.subr.bf16.mxu0 0
    %910 = vmatpush1.bf16.msra.mxu0 %v894
    %911 = vmatprep.subr.bf16.mxu0 0
    %912 = vmatpush1.bf16.msra.mxu0 %v895
    %913 = vmatprep.subr.bf16.mxu0 0
    %914 = vmatpush1.bf16.msra.mxu0 %v896
    %915 = vmatprep.subr.bf16.mxu0 0
    %916 = vmatpush1.bf16.msra.mxu0 %v897
    %917 = vmatprep.subr.bf16.mxu0 0
    %918 = vmatpush1.bf16.msra.mxu0 %v898
    %919 = vmatprep.subr.bf16.mxu0 0
    %920 = vmatpush1.bf16.msra.mxu0 %v899
    %921 = vmatprep.subr.bf16.mxu0 0
    %922 = vmatpush1.bf16.msra.mxu0 %v900
    %923 = vmatprep.subr.bf16.mxu0 0
    %924 = vmatpush1.bf16.msra.mxu0 %v901
    %925 = vmatprep.subr.bf16.mxu0 0
    %926 = vmatpush1.bf16.msra.mxu0 0
    %927 = vmatprep.subr.bf16.mxu0 0
    %928 = vmatpush1.bf16.msra.mxu0 0
    %929 = vmatprep.subr.bf16.mxu0 0
    %930 = vmatpush1.bf16.msra.mxu0 0
    %931 = vmatprep.subr.bf16.mxu0 0
    %932 = vmatpush1.bf16.msra.mxu0 0
    %933 = vmatprep.subr.bf16.mxu0 0
    %934 = vmatpush1.bf16.msra.mxu0 0
    %935 = vmatprep.subr.bf16.mxu0 0
    %936 = vmatpush1.bf16.msra.mxu0 0
    %937 = vmatprep.subr.bf16.mxu0 0
    %938 = vmatpush1.bf16.msra.mxu0 0
    %939 = vmatprep.subr.bf16.mxu0 0
    %940 = vmatpush1.bf16.msra.mxu0 0
    %941 = vmatprep.mubr.bf16.mxu0 0
    %942 = vmatmul.mubr.bf16.gmra.mrb[0].mxu0 %v902
    %v943 = vpop.f32.mrb[0].mxu0
    %v944 = vadd.f32 %v907, %v943
    %v945 = vpop.f32.mrb[0].mxu0
    %v946 = vpop.f32.mrb[0].mxu0
    %v947 = vpop.f32.mrb[0].mxu0
    %948 = vdwg.mxu0
    %949 = vst [vmem:[#allocation2] sm:$0xf] %v944
    // Predicated region
    $region38: #{tpu_custom_call.1} parent=1 // pred_check
      _
    $region39: #{tpu_custom_call.1} parent=1 // pred_check_branch
      %951 = sbr.rel (0) target = $region41
    $region40: #{tpu_custom_call.1} parent=1 // pred_region
      %s953 = ssub.s32 64, 64
      %954 = vsyncadd [#allocation3], %s953
      %s956 = sshll.u32 [#allocation2], 4
      %s957 = int_to_ptr.vmem [resolvable:$true] %s956
      %959 = dma.vmem_to_hbm [thread:$0]  %s957, 64, %s9, [#allocation3]
    $region41: #{tpu_custom_call.1} parent=1 // pred_fallthru
      _
    // Predicated region
    $region42: #{tpu_custom_call.1} parent=1 // pred_check
      _
    $region43: #{tpu_custom_call.1} parent=1 // pred_check_branch
      %961 = sbr.rel (0) target = $region45
    $region44: #{tpu_custom_call.1} parent=1 // pred_region
      %962 = dma.done [#allocation3], 64
    $region45: #{tpu_custom_call.1} parent=1 // pred_fallthru
      _
    %963 = vsyncpa [#allocation3], 1

</llo_original>
